<compile_context>
chip_gen: v5e
topology: v5e:2x2
jax: 0.10.0
libtpu: 0.0.40
codegen_flags: <defaults>
</compile_context>

<pallas_src>
import jax
import jax.numpy as jnp
from jax.experimental import pallas as pl
from jax.experimental.pallas import tpu as pltpu

_LANES = 128
_SUBLANES = 8
_VREG = _LANES * _SUBLANES  # 1024 elements per (8, 128) f32 vreg


def _cdiv(a, b):
    return (a + b - 1) // b


def _target_sum_kernel(t_ref, out_ref):
    """Reduce one dense (rows, 128) chunk of the zero-padded target to a scalar."""
    t = t_ref[...].astype(jnp.float32)                    # (rows, 128) dense vregs
    col = jnp.sum(t, axis=0, keepdims=True)               # (1, 128) vreg folds
    out_ref[...] = jnp.sum(col, axis=1, keepdims=True)    # (1, 1) one lane reduce


def dice_loss_pallas(output, target, smooth=1.0, eps=1e-7, chunk_bytes_cap=4 << 20):
    """DiceLoss forward.

    output: (N, C, H, W) logits (any float dtype).  Only its shape matters:
            softmax over channels cancels against the channel-broadcast target.
    target: (N, H, W) mask (float / int / bool); cast to f32 inside the kernel.
    """
    n, c, h, w = output.shape
    assert target.shape == (n, h, w), (output.shape, target.shape)
    hw = h * w
    total = n * hw

    itemsize = jnp.dtype(target.dtype).itemsize
    nvregs = max(1, _cdiv(total, _VREG))
    cap_vregs = max(1, chunk_bytes_cap // (_VREG * itemsize))
    # >= 2 chunks whenever there is more than one vreg of data so the
    # "parallel" grid axis can occupy both v7x TensorCores even for N == 1.
    num_chunks = max(_cdiv(nvregs, cap_vregs), 2 if nvregs >= 2 else 1)
    chunk_vregs = _cdiv(nvregs, num_chunks)
    chunk_elems = chunk_vregs * _VREG
    rows = chunk_vregs * _SUBLANES
    total_pad = chunk_elems * num_chunks

    t_flat = target.reshape(total)                 # free contiguous reshape
    if total_pad != total:
        # Zero padding is neutral for the sum; this copies only when ragged.
        t_flat = jnp.pad(t_flat, (0, total_pad - total))
    t3 = t_flat.reshape(num_chunks, rows, _LANES)

    partials = pl.pallas_call(
        _target_sum_kernel,
        grid=(num_chunks,),
        in_specs=[pl.BlockSpec((None, rows, _LANES), lambda i: (i, 0, 0))],
        out_specs=pl.BlockSpec((None, 1, 1), lambda i: (i, 0, 0)),
        out_shape=jax.ShapeDtypeStruct((num_chunks, 1, 1), jnp.float32),
        compiler_params=pltpu.CompilerParams(
            dimension_semantics=("parallel",),
        ),
    )(t3)

    s_t = jnp.sum(partials)                        # sum(target), exact in f32

    # Closed-form pieces (exact):
    #   sum(softmax(x) * t) = s_t            sum(softmax(x)) = N*H*W
    # Flipped branch (output -> 1-output, target -> 1-target):
    #   sum((1-p)*(1-t))  = N*C*H*W - N*H*W - C*sum(t) + sum(t)
    #   sum(1-p)+sum(1-t) = N*C*H*W - sum(t)
    n_hw = jnp.float32(n * hw)
    n_c_hw = jnp.float32(n * c * hw)
    inter = s_t
    denom = n_hw + s_t
    inter_f = n_c_hw - n_hw - jnp.float32(c) * s_t + s_t
    denom_f = n_c_hw - s_t
    use_flip = s_t == jnp.float32(0.0)             # torch.sum(target) == 0
    inter = jnp.where(use_flip, inter_f, inter)
    denom = jnp.where(use_flip, denom_f, denom)
    return 1.0 - (2.0 * inter + jnp.float32(smooth)) / (
        denom + jnp.float32(smooth) + jnp.float32(eps))


def dice_loss_ref(output, target, smooth=1.0, eps=1e-7):
    """Pure-JAX reference mirroring the PyTorch forward."""
    p = jax.nn.softmax(output.astype(jnp.float32), axis=1)
    t = target.astype(jnp.float32)[:, None, :, :]
    flip = jnp.sum(t) == 0.0
    p = jnp.where(flip, 1.0 - p, p)
    t = jnp.where(flip, 1.0 - t, t)
    return 1.0 - (2.0 * jnp.sum(p * t) + smooth) / (
        jnp.sum(p) + jnp.sum(t) + smooth + eps)


if __name__ == "__main__":
    key = jax.random.PRNGKey(0)
    k1, k2, k3, k4 = jax.random.split(key, 4)
    tol = dict(rtol=1e-4, atol=1e-4)

    def check(logits, tgt, **kw):
        got = jax.block_until_ready(dice_loss_pallas(logits, tgt, **kw))
        want = jax.block_until_ready(dice_loss_ref(logits, tgt))
        assert jnp.allclose(got, want, **tol), (got, want)

    # 1) basic case
    N, C, H, W = 2, 4, 16, 16
    logits = jax.random.normal(k1, (N, C, H, W), dtype=jnp.float32)
    tgt = jax.random.bernoulli(k2, p=0.3, shape=(N, H, W)).astype(jnp.float32)
    check(logits, tgt)

    # 2) all-zero target (exercises the flip branch)
    check(logits, jnp.zeros((N, H, W), jnp.float32))

    # 3) bf16 logits (interface unchanged; loss depends on logits only via shape)
    check(logits.astype(jnp.bfloat16), tgt)

    # 4) ragged spatial size (exercises the zero-padding path)
    logits_o = jax.random.normal(k3, (2, 3, 7, 9), dtype=jnp.float32)
    tgt_o = jax.random.bernoulli(k4, p=0.4, shape=(2, 7, 9)).astype(jnp.float32)
    check(logits_o, tgt_o)

    # 5) multi-chunk "parallel" grid (>= 2 grid steps) via a tiny chunk cap
    logits_m = jax.random.normal(k1, (2, 4, 32, 32), dtype=jnp.float32)
    tgt_m = jax.random.bernoulli(k2, p=0.5, shape=(2, 32, 32)).astype(jnp.float32)
    check(logits_m, tgt_m, chunk_bytes_cap=4096)

    print("KERNEL_OK")
</pallas_src>

<mosaic_0001>
module attributes {stable_mosaic.version = 11 : i64} {
  func.func @_target_sum_kernel(%arg0: i32, %arg1: memref<1x8x128xf32, #tpu.memory_space<vmem>>, %arg2: memref<1x1x1xf32, #tpu.memory_space<vmem>>) attributes {dimension_semantics = [#tpu.dimension_semantics<parallel>], iteration_bounds = array<i64: 1>, scalar_prefetch = 0 : i64, scratch_operands = 0 : i64, tpu.core_type = #tpu.core_type<tc>, window_params = [{transform_indices = @transform_0, window_bounds = array<i64: 1, 8, 128>}, {transform_indices = @transform_1, window_bounds = array<i64: 1, 1, 1>}]} {
    %c0 = arith.constant 0 : index
    %c0_0 = arith.constant 0 : index
    %c0_1 = arith.constant 0 : index
    %0 = vector.load %arg1[%c0, %c0_0, %c0_1] : memref<1x8x128xf32, #tpu.memory_space<vmem>>, vector<1x8x128xf32>
    %1 = vector.shape_cast %0 : vector<1x8x128xf32> to vector<8x128xf32>
    %cst = arith.constant dense<0.000000e+00> : vector<128xf32>
    %2 = vector.multi_reduction <add>, %1, %cst [0] : vector<8x128xf32> to vector<128xf32>
    %3 = vector.shape_cast %2 : vector<128xf32> to vector<1x128xf32>
    %cst_2 = arith.constant dense<0.000000e+00> : vector<1xf32>
    %4 = vector.multi_reduction <add>, %3, %cst_2 [1] : vector<1x128xf32> to vector<1xf32>
    %5 = vector.shape_cast %4 : vector<1xf32> to vector<1x1xf32>
    %c0_3 = arith.constant 0 : index
    %c0_4 = arith.constant 0 : index
    %c0_5 = arith.constant 0 : index
    %6 = vector.load %arg2[%c0_3, %c0_4, %c0_5] : memref<1x1x1xf32, #tpu.memory_space<vmem>>, vector<1x1x1xf32>
    %7 = vector.shape_cast %6 : vector<1x1x1xf32> to vector<1x1xf32>
    %8 = vector.shape_cast %5 : vector<1x1xf32> to vector<1x1x1xf32>
    tpu.vector_store %arg2[%c0_3, %c0_4, %c0_5], %8 {strides = array<i32>} : memref<1x1x1xf32, #tpu.memory_space<vmem>>, vector<1x1x1xf32>,
    return
  }
  func.func @transform_0(%arg0: i32) -> (i32, i32, i32) {
    %c0_i32 = arith.constant 0 : i32
    %c0_i32_0 = arith.constant 0 : i32
    %c0_i32_1 = arith.constant 0 : i32
    return %arg0, %c0_i32, %c0_i32_0 : i32, i32, i32
  }
  func.func @transform_1(%arg0: i32) -> (i32, i32, i32) {
    %c0_i32 = arith.constant 0 : i32
    %c0_i32_0 = arith.constant 0 : i32
    %c0_i32_1 = arith.constant 0 : i32
    return %arg0, %c0_i32, %c0_i32_0 : i32, i32, i32
  }
}

</mosaic_0001>

<llo_original>
// kernel: tpu_custom_call.1
$region0: #{tpu_custom_call.1}
  #allocation0 [shape = 'u32[]', space=smem, size = 0x4, offset = 0x4, fixed_abs, tag = 'smem constant byte address 0x4 - core index']
  #allocation1 [shape = 'u32[72,128]{1,0:T(1,128)}', space=vmem, size = 0x9000, scoped, tag = 'internal scratch']
  %s0 = inlined_call_operand.hbm [shape: f32[1,8,128], index: 0, kind: input, shape index: {}]
  %s1 = inlined_call_operand.hbm [shape: f32[1,1,1], index: 1, kind: output, shape index: {}]
  %s2 = sld [smem:[#allocation0]]
  $region18: #{tpu_custom_call.1} parent=0
    _
  %s4 = ssub.s32 1, %s2
  %s5 = scalar_select 0, %s4, %s2
  $region1: #{tpu_custom_call.1} parent=0
    #allocation2 [shape = 'u8[4096]{0}', space=vmem, size = 0x1000, scoped, tag = 'input window, operand 0, single buffered']
    #allocation3 [shape = 's32[1]{0}', space=sflag, size = 0x4, scoped, tag = 'scoped memory for tpu_custom_call.1']
    #allocation4 [shape = 's32[1]{0}', space=sflag, size = 0x4, scoped, tag = 'scoped memory for tpu_custom_call.1']
    #allocation5 [shape = 'u8[512]{0}', space=vmem, size = 0x400, scoped, tag = 'output window, operand 0, single buffered']
    %6 = vsyncpa [#allocation3], 0
    %7 = vsyncpa [#allocation4], 0
    // Predicated region
    $region2: #{tpu_custom_call.1} parent=1 // pred_check
      _
    $region3: #{tpu_custom_call.1} parent=1 // pred_check_branch
      %9 = sbr.rel (0) target = $region5
    $region4: #{tpu_custom_call.1} parent=1 // pred_region
      %11 = vsyncadd [#allocation3], 0
      %s13 = sshll.u32 %s0, 4
      %s14 = int_to_ptr.hbm [resolvable:$true] %s13
      %s15 = sshll.u32 [#allocation2], 4
      %s16 = int_to_ptr.vmem [resolvable:$true] %s15
      %18 = dma.hbm_to_vmem [thread:$0]  %s14, 128, %s16, [#allocation3]
    $region5: #{tpu_custom_call.1} parent=1 // pred_fallthru
      _
    // Predicated region
    $region6: #{tpu_custom_call.1} parent=1 // pred_check
      _
    $region7: #{tpu_custom_call.1} parent=1 // pred_check_branch
      %20 = sbr.rel (0) target = $region9
    $region8: #{tpu_custom_call.1} parent=1 // pred_region
      %22 = dma.done [#allocation3], 128
    $region9: #{tpu_custom_call.1} parent=1 // pred_fallthru
      _
    %v23 = vld [vmem:[#allocation2] sm:$0xff]
    %v24 = vrot.slane %v23, 4
    %v25 = vadd.f32 %v23, %v24
    %v26 = vrot.slane %v25, 2
    %v27 = vadd.f32 %v25, %v26
    %v28 = vrot.slane %v27, 1
    %v29 = vadd.f32 %v27, %v28
    %30 = vadd.xlane.f32.xlu0 %v29
    %v31 = vpop.xlane.xlu0 %30
    %vm32 = vcmask 0
    %33 = vst.msk [vmem:[#allocation5] sm:$0x1] %vm32, %v31
    // Predicated region
    $region10: #{tpu_custom_call.1} parent=1 // pred_check
      _
    $region11: #{tpu_custom_call.1} parent=1 // pred_check_branch
      %35 = sbr.rel (0) target = $region13
    $region12: #{tpu_custom_call.1} parent=1 // pred_region
      %37 = vsyncadd [#allocation4], 0
      %s39 = sshll.u32 [#allocation5], 4
      %s40 = int_to_ptr.vmem [resolvable:$true] %s39
      %s41 = sshll.u32 %s1, 4
      %s42 = int_to_ptr.hbm [resolvable:$true] %s41
      %44 = dma.vmem_to_hbm [thread:$0]  %s40, 16, %s42, [#allocation4]
    $region13: #{tpu_custom_call.1} parent=1 // pred_fallthru
      _
    // Predicated region
    $region14: #{tpu_custom_call.1} parent=1 // pred_check
      _
    $region15: #{tpu_custom_call.1} parent=1 // pred_check_branch
      %46 = sbr.rel (0) target = $region17
    $region16: #{tpu_custom_call.1} parent=1 // pred_region
      %48 = dma.done [#allocation4], 16
    $region17: #{tpu_custom_call.1} parent=1 // pred_fallthru
      _
    %49 = vsyncpa [#allocation3], 1
    %50 = vsyncpa [#allocation4], 1

</llo_original>
